<compile_context>
chip_gen: v7x
topology: tpu7x:2x2x1
jax: 0.10.0
libtpu: 0.0.40
codegen_flags: <defaults>
</compile_context>

<pallas_src>
import functools

import jax
import jax.numpy as jnp
from jax.experimental import pallas as pl
from jax.experimental.pallas import tpu as pltpu


# ----------------------------- Pallas kernel -------------------------------

def _conv_gap_head_kernel(x_ref, wc_ref, bc_ref, wh_ref, bh_ref, pred_ref,
                          *, B, HW, chunk, inv_hw):
    """Fused backbone (3x3 conv + ReLU + GAP) and head (Linear + sigmoid).

    x_ref:    (B*HW, Kp)  bf16  lane-dense im2col patches (Kp = 9*C zero-padded to 128)
    wc_ref:   (Kp, CfP)   bf16  conv weight in im2col layout, K rows zero-padded
    bc_ref:   (1, CfP)    f32   conv bias (zero in padded lanes)
    wh_ref:   (CfP, PP)   bf16  head weight (zero in padded rows/cols)
    bh_ref:   (1, PP)     f32   head bias (zero in padded lanes)
    pred_ref: (B, PP)     f32   sigmoid predictions (full-array, lane-dense block)
    """
    wc = wc_ref[...]                               # hoist weight/bias loads out of loop
    bc = bc_ref[...]
    cfp = wc.shape[1]

    feats = []
    for b in range(B):                             # static unrolled (tiny B)
        feat = jnp.zeros((1, cfp), jnp.float32)
        for c in range(HW // chunk):               # static unrolled row chunks
            start = b * HW + c * chunk             # multiple of 128 -> sublane aligned
            sl = x_ref[start:start + chunk, :]     # (chunk, Kp) bf16
            acc = jnp.dot(sl, wc,                  # single lane-dense MXU dot, f32 acc
                          preferred_element_type=jnp.float32)
            conv = jnp.maximum(acc + bc, 0.0)      # bias + ReLU (VPU)
            feat = feat + jnp.sum(conv, axis=0, keepdims=True)   # partial GAP row-sum
        feats.append(feat * inv_hw)                # finish global average pool
    feat_all = jnp.concatenate(feats, axis=0)      # (B, CfP) f32, stays in registers

    # Fused head: Linear + sigmoid; feat kept in f32 (matches reference math).
    logits = jnp.dot(feat_all, wh_ref[...].astype(jnp.float32),
                     preferred_element_type=jnp.float32) + bh_ref[...]
    pred_ref[...] = jax.nn.sigmoid(logits)


# ------------------------------ JAX glue -----------------------------------

def pastanet_forward(x_nchw, gt_labels, img_metas, params):
    """Eval-branch forward: backbone(x) -> head.simple_test(feat, ...)."""
    del gt_labels, img_metas  # metadata only; unused by the synthetic head

    w_conv = params["w_conv"]          # (Kp, CfP) bf16
    b_conv = params["b_conv"]          # (1, CfP)  f32
    w_head = params["w_head"]          # (CfP, PP) bf16
    b_head = params["b_head"]          # (1, PP)   f32
    n_pasta = params["n_pasta"]        # static int

    B, C, H, W = x_nchw.shape
    HW = H * W
    Kp, CfP = w_conv.shape
    PP = w_head.shape[1]

    # im2col in the wrapper: only the H*W valid output pixels (no wrap columns,
    # no GAP mask needed). The patch slab is lane-dense after zero-padding the
    # contraction dim 9*C -> Kp=128; padded K rows of w_conv are zero so they
    # contribute nothing.
    x_nhwc = jnp.transpose(x_nchw, (0, 2, 3, 1)).astype(jnp.bfloat16)
    xp = jnp.pad(x_nhwc, ((0, 0), (1, 1), (1, 1), (0, 0)))       # (B, H+2, W+2, C)
    cols = [xp[:, dy:dy + H, dx:dx + W, :] for dy in range(3) for dx in range(3)]
    patches = jnp.concatenate(cols, axis=-1).reshape(B, HW, 9 * C)
    patches = jnp.pad(patches, ((0, 0), (0, 0), (0, Kp - 9 * C)))
    patches = patches.reshape(B * HW, Kp)                        # (512, 128) bf16

    chunk = 128 if HW % 128 == 0 else HW   # row tile: caps live f32 acc at ~16 vregs

    kernel = functools.partial(_conv_gap_head_kernel, B=B, HW=HW, chunk=chunk,
                               inv_hw=1.0 / float(HW))

    pred_pad = pl.pallas_call(
        kernel,
        out_shape=jax.ShapeDtypeStruct((B, PP), jnp.float32),
        grid_spec=pltpu.PrefetchScalarGridSpec(
            num_scalar_prefetch=0,
            grid=(1,),                               # single fused step: no per-sample
            in_specs=[                               # grid overhead / weight re-staging
                pl.BlockSpec((B * HW, Kp), lambda i: (0, 0)),
                pl.BlockSpec((Kp, CfP), lambda i: (0, 0)),
                pl.BlockSpec((1, CfP), lambda i: (0, 0)),
                pl.BlockSpec((CfP, PP), lambda i: (0, 0)),
                pl.BlockSpec((1, PP), lambda i: (0, 0)),
            ],
            out_specs=pl.BlockSpec((B, PP), lambda i: (0, 0)),   # full-array block
        ),
        compiler_params=pltpu.CompilerParams(
            dimension_semantics=("arbitrary",)),
    )(patches, w_conv, b_conv, w_head, b_head)

    return pred_pad[:, :n_pasta]       # strip lane padding


def init_params(key, c_in=4, c_feat=32, n_pasta=16, k_pad=128, cf_pad=128, p_pad=128):
    """Deterministic synthetic parameters, zero-padded to 128-lane shapes."""
    k1, k2, k3, k4 = jax.random.split(key, 4)
    K = 9 * c_in
    # Conv weight in im2col-matmul layout [K, c_feat] with (dy, dx, C) tap order.
    w_conv = jax.random.normal(k1, (K, c_feat), jnp.float32) * (1.0 / jnp.sqrt(K))
    b_conv = jax.random.normal(k2, (1, c_feat), jnp.float32) * 0.01
    w_head = (jax.random.normal(k3, (c_feat, n_pasta), jnp.float32)
              * (1.0 / jnp.sqrt(c_feat)))
    b_head = jax.random.normal(k4, (1, n_pasta), jnp.float32) * 0.01

    return {
        # zero padding in the extra rows/lanes keeps conv/GAP/logits unaffected
        "w_conv": jnp.pad(w_conv, ((0, k_pad - K),
                                   (0, cf_pad - c_feat))).astype(jnp.bfloat16),
        "b_conv": jnp.pad(b_conv, ((0, 0), (0, cf_pad - c_feat))),
        "w_head": jnp.pad(w_head, ((0, cf_pad - c_feat),
                                   (0, p_pad - n_pasta))).astype(jnp.bfloat16),
        "b_head": jnp.pad(b_head, ((0, 0), (0, p_pad - n_pasta))),
        "n_pasta": n_pasta,
        "c_in": c_in,
    }


def _reference_forward(x_nchw, params):
    """Pure-JAX reference (same bf16-rounded params/input, f32 math)."""
    B, C, H, W = x_nchw.shape
    K = 9 * C
    wc = params["w_conv"].astype(jnp.float32)[:K, :]
    bc = params["b_conv"]
    wh = params["w_head"].astype(jnp.float32)
    bh = params["b_head"]
    n_pasta = params["n_pasta"]
    x = jnp.transpose(x_nchw, (0, 2, 3, 1)).astype(jnp.bfloat16).astype(jnp.float32)
    xp = jnp.pad(x, ((0, 0), (1, 1), (1, 1), (0, 0)))
    cols = [xp[:, dy:dy + H, dx:dx + W, :] for dy in range(3) for dx in range(3)]
    patches = jnp.concatenate(cols, axis=-1).reshape(B, H * W, K)
    conv = jnp.maximum(jnp.einsum("bpk,kf->bpf", patches, wc) + bc, 0.0)
    feat = jnp.mean(conv, axis=1)
    logits = feat @ wh + bh
    return jax.nn.sigmoid(logits)[:, :n_pasta]


if __name__ == "__main__":
    key = jax.random.PRNGKey(0)
    kx, kp = jax.random.split(key)

    B, C, H, W = 2, 4, 16, 16
    n_pasta = 16

    x = jax.random.normal(kx, (B, C, H, W), jnp.float32)      # NCHW, like PyTorch
    gt_labels = jnp.zeros((B, n_pasta), jnp.float32)          # unused metadata
    img_metas = None                                          # unused metadata

    params = init_params(kp, c_in=C, c_feat=32, n_pasta=n_pasta)

    pred = pastanet_forward(x, gt_labels, img_metas, params)
    pred = jax.block_until_ready(pred)

    assert pred.shape == (B, n_pasta)
    assert bool(jnp.all(jnp.isfinite(pred)))

    ref = _reference_forward(x, params)
    max_err = float(jnp.max(jnp.abs(pred - ref)))
    assert max_err < 3e-2, f"mismatch vs pure-JAX reference: {max_err}"

    print("KERNEL_OK")
</pallas_src>

<mosaic_0001>
module attributes {stable_mosaic.version = 11 : i64} {
  func.func @_conv_gap_head_kernel(%arg0: i32, %arg1: memref<512x128xbf16, #tpu.memory_space<vmem>>, %arg2: memref<128x128xbf16, #tpu.memory_space<vmem>>, %arg3: memref<1x128xf32, #tpu.memory_space<vmem>>, %arg4: memref<128x128xbf16, #tpu.memory_space<vmem>>, %arg5: memref<1x128xf32, #tpu.memory_space<vmem>>, %arg6: memref<2x128xf32, #tpu.memory_space<vmem>>) attributes {dimension_semantics = [#tpu.dimension_semantics<arbitrary>], iteration_bounds = array<i64: 1>, scalar_prefetch = 0 : i64, scratch_operands = 0 : i64, tpu.core_type = #tpu.core_type<tc>, window_params = [{pipeline_mode = #tpu.pipeline_mode<synchronous>, transform_indices = @transform_0, window_bounds = array<i64: 512, 128>}, {pipeline_mode = #tpu.pipeline_mode<synchronous>, transform_indices = @transform_1, window_bounds = array<i64: 128, 128>}, {pipeline_mode = #tpu.pipeline_mode<synchronous>, transform_indices = @transform_2, window_bounds = array<i64: 1, 128>}, {pipeline_mode = #tpu.pipeline_mode<synchronous>, transform_indices = @transform_3, window_bounds = array<i64: 128, 128>}, {pipeline_mode = #tpu.pipeline_mode<synchronous>, transform_indices = @transform_4, window_bounds = array<i64: 1, 128>}, {pipeline_mode = #tpu.pipeline_mode<synchronous>, transform_indices = @transform_5, window_bounds = array<i64: 2, 128>}]} {
    %c0 = arith.constant 0 : index
    %c0_0 = arith.constant 0 : index
    %0 = vector.load %arg2[%c0, %c0_0] : memref<128x128xbf16, #tpu.memory_space<vmem>>, vector<128x128xbf16>
    %c0_1 = arith.constant 0 : index
    %c0_2 = arith.constant 0 : index
    %1 = vector.load %arg3[%c0_1, %c0_2] : memref<1x128xf32, #tpu.memory_space<vmem>>, vector<1x128xf32>
    %cst = arith.constant 0.000000e+00 : f32
    %2 = vector.broadcast %cst : f32 to vector<1x128xf32>
    %c0_3 = arith.constant 0 : index
    %c0_4 = arith.constant 0 : index
    %3 = vector.load %arg1[%c0_3, %c0_4] : memref<512x128xbf16, #tpu.memory_space<vmem>>, vector<128x128xbf16>
    %cst_5 = arith.constant dense<0.000000e+00> : vector<128x128xf32>
    %4 = tpu.matmul %3, %0, %cst_5 {dimension_numbers = #tpu.dot_dimension_numbers<[1], [0], [0], [1], [0, 0, 1, 1], [], []>} : vector<128x128xbf16>, vector<128x128xbf16>, vector<128x128xf32> -> vector<128x128xf32>
    %5 = vector.broadcast %1 : vector<1x128xf32> to vector<128x128xf32>
    %6 = arith.addf %4, %5 : vector<128x128xf32>
    %cst_6 = arith.constant 0.000000e+00 : f32
    %7 = vector.broadcast %cst_6 : f32 to vector<128x128xf32>
    %8 = arith.maximumf %6, %7 : vector<128x128xf32>
    %cst_7 = arith.constant dense<0.000000e+00> : vector<128xf32>
    %9 = vector.multi_reduction <add>, %8, %cst_7 [0] : vector<128x128xf32> to vector<128xf32>
    %10 = vector.shape_cast %9 : vector<128xf32> to vector<1x128xf32>
    %11 = arith.addf %2, %10 : vector<1x128xf32>
    %c128 = arith.constant 128 : index
    %c0_8 = arith.constant 0 : index
    %12 = vector.load %arg1[%c128, %c0_8] : memref<512x128xbf16, #tpu.memory_space<vmem>>, vector<128x128xbf16>
    %cst_9 = arith.constant dense<0.000000e+00> : vector<128x128xf32>
    %13 = tpu.matmul %12, %0, %cst_9 {dimension_numbers = #tpu.dot_dimension_numbers<[1], [0], [0], [1], [0, 0, 1, 1], [], []>} : vector<128x128xbf16>, vector<128x128xbf16>, vector<128x128xf32> -> vector<128x128xf32>
    %14 = vector.broadcast %1 : vector<1x128xf32> to vector<128x128xf32>
    %15 = arith.addf %13, %14 : vector<128x128xf32>
    %cst_10 = arith.constant 0.000000e+00 : f32
    %16 = vector.broadcast %cst_10 : f32 to vector<128x128xf32>
    %17 = arith.maximumf %15, %16 : vector<128x128xf32>
    %cst_11 = arith.constant dense<0.000000e+00> : vector<128xf32>
    %18 = vector.multi_reduction <add>, %17, %cst_11 [0] : vector<128x128xf32> to vector<128xf32>
    %19 = vector.shape_cast %18 : vector<128xf32> to vector<1x128xf32>
    %20 = arith.addf %11, %19 : vector<1x128xf32>
    %cst_12 = arith.constant 3.906250e-03 : f32
    %21 = vector.broadcast %cst_12 : f32 to vector<1x128xf32>
    %22 = arith.mulf %20, %21 : vector<1x128xf32>
    %cst_13 = arith.constant 0.000000e+00 : f32
    %23 = vector.broadcast %cst_13 : f32 to vector<1x128xf32>
    %c256 = arith.constant 256 : index
    %c0_14 = arith.constant 0 : index
    %24 = vector.load %arg1[%c256, %c0_14] : memref<512x128xbf16, #tpu.memory_space<vmem>>, vector<128x128xbf16>
    %cst_15 = arith.constant dense<0.000000e+00> : vector<128x128xf32>
    %25 = tpu.matmul %24, %0, %cst_15 {dimension_numbers = #tpu.dot_dimension_numbers<[1], [0], [0], [1], [0, 0, 1, 1], [], []>} : vector<128x128xbf16>, vector<128x128xbf16>, vector<128x128xf32> -> vector<128x128xf32>
    %26 = vector.broadcast %1 : vector<1x128xf32> to vector<128x128xf32>
    %27 = arith.addf %25, %26 : vector<128x128xf32>
    %cst_16 = arith.constant 0.000000e+00 : f32
    %28 = vector.broadcast %cst_16 : f32 to vector<128x128xf32>
    %29 = arith.maximumf %27, %28 : vector<128x128xf32>
    %cst_17 = arith.constant dense<0.000000e+00> : vector<128xf32>
    %30 = vector.multi_reduction <add>, %29, %cst_17 [0] : vector<128x128xf32> to vector<128xf32>
    %31 = vector.shape_cast %30 : vector<128xf32> to vector<1x128xf32>
    %32 = arith.addf %23, %31 : vector<1x128xf32>
    %c384 = arith.constant 384 : index
    %c0_18 = arith.constant 0 : index
    %33 = vector.load %arg1[%c384, %c0_18] : memref<512x128xbf16, #tpu.memory_space<vmem>>, vector<128x128xbf16>
    %cst_19 = arith.constant dense<0.000000e+00> : vector<128x128xf32>
    %34 = tpu.matmul %33, %0, %cst_19 {dimension_numbers = #tpu.dot_dimension_numbers<[1], [0], [0], [1], [0, 0, 1, 1], [], []>} : vector<128x128xbf16>, vector<128x128xbf16>, vector<128x128xf32> -> vector<128x128xf32>
    %35 = vector.broadcast %1 : vector<1x128xf32> to vector<128x128xf32>
    %36 = arith.addf %34, %35 : vector<128x128xf32>
    %cst_20 = arith.constant 0.000000e+00 : f32
    %37 = vector.broadcast %cst_20 : f32 to vector<128x128xf32>
    %38 = arith.maximumf %36, %37 : vector<128x128xf32>
    %cst_21 = arith.constant dense<0.000000e+00> : vector<128xf32>
    %39 = vector.multi_reduction <add>, %38, %cst_21 [0] : vector<128x128xf32> to vector<128xf32>
    %40 = vector.shape_cast %39 : vector<128xf32> to vector<1x128xf32>
    %41 = arith.addf %32, %40 : vector<1x128xf32>
    %cst_22 = arith.constant 3.906250e-03 : f32
    %42 = vector.broadcast %cst_22 : f32 to vector<1x128xf32>
    %43 = arith.mulf %41, %42 : vector<1x128xf32>
    %44 = tpu.concatenate %22, %43 in 0 : vector<1x128xf32>, vector<1x128xf32> -> vector<2x128xf32>
    %c0_23 = arith.constant 0 : index
    %c0_24 = arith.constant 0 : index
    %45 = vector.load %arg4[%c0_23, %c0_24] : memref<128x128xbf16, #tpu.memory_space<vmem>>, vector<128x128xbf16>
    %46 = arith.extf %45 : vector<128x128xbf16> to vector<128x128xf32>
    %cst_25 = arith.constant dense<0.000000e+00> : vector<2x128xf32>
    %47 = tpu.matmul %44, %46, %cst_25 {dimension_numbers = #tpu.dot_dimension_numbers<[1], [0], [0], [1], [0, 0, 1, 1], [], []>} : vector<2x128xf32>, vector<128x128xf32>, vector<2x128xf32> -> vector<2x128xf32>
    %c0_26 = arith.constant 0 : index
    %c0_27 = arith.constant 0 : index
    %48 = vector.load %arg5[%c0_26, %c0_27] : memref<1x128xf32, #tpu.memory_space<vmem>>, vector<1x128xf32>
    %49 = vector.broadcast %48 : vector<1x128xf32> to vector<2x128xf32>
    %50 = arith.addf %47, %49 : vector<2x128xf32>
    %51 = arith.negf %50 : vector<2x128xf32>
    %52 = math.exp %51 : vector<2x128xf32>
    %cst_28 = arith.constant 1.000000e+00 : f32
    %53 = vector.broadcast %cst_28 : f32 to vector<2x128xf32>
    %54 = arith.addf %53, %52 : vector<2x128xf32>
    %55 = arith.divf %53, %54 : vector<2x128xf32>
    %c0_29 = arith.constant 0 : index
    %c0_30 = arith.constant 0 : index
    %56 = vector.load %arg6[%c0_29, %c0_30] : memref<2x128xf32, #tpu.memory_space<vmem>>, vector<2x128xf32>
    tpu.vector_store %arg6[%c0_29, %c0_30], %55 {strides = array<i32>} : memref<2x128xf32, #tpu.memory_space<vmem>>, vector<2x128xf32>,
    return
  }
  func.func @transform_0(%arg0: i32) -> (i32, i32) {
    %c0_i32 = arith.constant 0 : i32
    %c0_i32_0 = arith.constant 0 : i32
    %c0_i32_1 = arith.constant 0 : i32
    return %c0_i32, %c0_i32_0 : i32, i32
  }
  func.func @transform_1(%arg0: i32) -> (i32, i32) {
    %c0_i32 = arith.constant 0 : i32
    %c0_i32_0 = arith.constant 0 : i32
    %c0_i32_1 = arith.constant 0 : i32
    return %c0_i32, %c0_i32_0 : i32, i32
  }
  func.func @transform_2(%arg0: i32) -> (i32, i32) {
    %c0_i32 = arith.constant 0 : i32
    %c0_i32_0 = arith.constant 0 : i32
    %c0_i32_1 = arith.constant 0 : i32
    return %c0_i32, %c0_i32_0 : i32, i32
  }
  func.func @transform_3(%arg0: i32) -> (i32, i32) {
    %c0_i32 = arith.constant 0 : i32
    %c0_i32_0 = arith.constant 0 : i32
    %c0_i32_1 = arith.constant 0 : i32
    return %c0_i32, %c0_i32_0 : i32, i32
  }
  func.func @transform_4(%arg0: i32) -> (i32, i32) {
    %c0_i32 = arith.constant 0 : i32
    %c0_i32_0 = arith.constant 0 : i32
    %c0_i32_1 = arith.constant 0 : i32
    return %c0_i32, %c0_i32_0 : i32, i32
  }
  func.func @transform_5(%arg0: i32) -> (i32, i32) {
    %c0_i32 = arith.constant 0 : i32
    %c0_i32_0 = arith.constant 0 : i32
    %c0_i32_1 = arith.constant 0 : i32
    return %c0_i32, %c0_i32_0 : i32, i32
  }
}

</mosaic_0001>

<llo_original>
// kernel: tpu_custom_call.1
$region0: #{tpu_custom_call.1}
  #allocation0 [shape = 'u32[]', space=smem, size = 0x4, offset = 0x4, fixed_abs, tag = 'smem constant byte address 0x4 - core index']
  #allocation1 [shape = 'u32[144,128]{1,0:T(1,128)}', space=vmem, size = 0x12000, scoped, tag = 'internal scratch']
  %s0 = inlined_call_operand.hbm [shape: bf16[512,128], index: 0, kind: input, shape index: {}]
  %s1 = inlined_call_operand.hbm [shape: bf16[128,128], index: 1, kind: input, shape index: {}]
  %s2 = inlined_call_operand.vmem [shape: f32[1,128], index: 2, kind: input, shape index: {}]
  %s3 = inlined_call_operand.hbm [shape: bf16[128,128], index: 3, kind: input, shape index: {}]
  %s4 = inlined_call_operand.vmem [shape: f32[1,128], index: 4, kind: input, shape index: {}]
  %s5 = inlined_call_operand.hbm [shape: f32[2,128], index: 5, kind: output, shape index: {}]
  %s6 = sld [smem:[#allocation0]]
  $region42: #{tpu_custom_call.1} parent=0
    _
  %s8 = ssub.s32 1, %s6
  %s9 = scalar_select 0, %s8, %s6
  $region1: #{tpu_custom_call.1} parent=0
    #allocation2 [shape = 'u8[131072]{0}', space=vmem, size = 0x20000, scoped, tag = 'input window, operand 0, single buffered']
    #allocation3 [shape = 's32[1]{0}', space=sflag, size = 0x4, scoped, tag = 'scoped memory for tpu_custom_call.1']
    #allocation4 [shape = 's32[1]{0}', space=sflag, size = 0x4, scoped, tag = 'scoped memory for tpu_custom_call.1']
    #allocation5 [shape = 'u8[32768]{0}', space=vmem, size = 0x8000, scoped, tag = 'input window, operand 1, single buffered']
    #allocation6 [shape = 's32[1]{0}', space=sflag, size = 0x4, scoped, tag = 'scoped memory for tpu_custom_call.1']
    #allocation7 [shape = 'u8[32768]{0}', space=vmem, size = 0x8000, scoped, tag = 'input window, operand 3, single buffered']
    #allocation8 [shape = 'u8[1024]{0}', space=vmem, size = 0x400, scoped, tag = 'output window, operand 0, single buffered']
    %10 = vsyncpa [#allocation3], 0
    %11 = vsyncpa [#allocation6], 0
    %12 = vsyncpa [#allocation4], 0
    // Predicated region
    $region2: #{tpu_custom_call.1} parent=1 // pred_check
      _
    $region3: #{tpu_custom_call.1} parent=1 // pred_check_branch
      %14 = sbr.rel (0) target = $region5
    $region4: #{tpu_custom_call.1} parent=1 // pred_region
      %s16 = ssub.s32 4096, 4096
      %17 = vsyncadd [#allocation3], %s16
      %s18 = sshll.u32 [#allocation2], 4
      %s19 = int_to_ptr.vmem [resolvable:$true] %s18
      %24 = dma.hbm_to_vmem [thread:$0]  %s0, 4096, %s19, [#allocation3], 64, 64, 4
    $region5: #{tpu_custom_call.1} parent=1 // pred_fallthru
      _
    // Predicated region
    $region6: #{tpu_custom_call.1} parent=1 // pred_check
      _
    $region7: #{tpu_custom_call.1} parent=1 // pred_check_branch
      %26 = sbr.rel (0) target = $region9
    $region8: #{tpu_custom_call.1} parent=1 // pred_region
      %s28 = ssub.s32 1024, 1024
      %29 = vsyncadd [#allocation6], %s28
      %s30 = sshll.u32 [#allocation5], 4
      %s31 = int_to_ptr.vmem [resolvable:$true] %s30
      %36 = dma.hbm_to_vmem [thread:$0]  %s1, 1024, %s31, [#allocation6], 64, 64, 4
    $region9: #{tpu_custom_call.1} parent=1 // pred_fallthru
      _
    // Predicated region
    $region10: #{tpu_custom_call.1} parent=1 // pred_check
      _
    $region11: #{tpu_custom_call.1} parent=1 // pred_check_branch
      %38 = sbr.rel (0) target = $region13
    $region12: #{tpu_custom_call.1} parent=1 // pred_region
      _
    $region13: #{tpu_custom_call.1} parent=1 // pred_fallthru
      _
    // Predicated region
    $region14: #{tpu_custom_call.1} parent=1 // pred_check
      _
    $region15: #{tpu_custom_call.1} parent=1 // pred_check_branch
      %40 = sbr.rel (0) target = $region17
    $region16: #{tpu_custom_call.1} parent=1 // pred_region
      %s42 = ssub.s32 1024, 1024
      %43 = vsyncadd [#allocation6], %s42
      %s44 = sshll.u32 [#allocation7], 4
      %s45 = int_to_ptr.vmem [resolvable:$true] %s44
      %50 = dma.hbm_to_vmem [thread:$0]  %s3, 1024, %s45, [#allocation6], 64, 64, 4
    $region17: #{tpu_custom_call.1} parent=1 // pred_fallthru
      _
    // Predicated region
    $region18: #{tpu_custom_call.1} parent=1 // pred_check
      _
    $region19: #{tpu_custom_call.1} parent=1 // pred_check_branch
      %52 = sbr.rel (0) target = $region21
    $region20: #{tpu_custom_call.1} parent=1 // pred_region
      _
    $region21: #{tpu_custom_call.1} parent=1 // pred_fallthru
      _
    // Predicated region
    $region22: #{tpu_custom_call.1} parent=1 // pred_check
      _
    $region23: #{tpu_custom_call.1} parent=1 // pred_check_branch
      %54 = sbr.rel (0) target = $region25
    $region24: #{tpu_custom_call.1} parent=1 // pred_region
      %55 = dma.done [#allocation3], 4096
    $region25: #{tpu_custom_call.1} parent=1 // pred_fallthru
      _
    // Predicated region
    $region26: #{tpu_custom_call.1} parent=1 // pred_check
      _
    $region27: #{tpu_custom_call.1} parent=1 // pred_check_branch
      %57 = sbr.rel (0) target = $region29
    $region28: #{tpu_custom_call.1} parent=1 // pred_region
      %58 = dma.done [#allocation6], 1024
    $region29: #{tpu_custom_call.1} parent=1 // pred_fallthru
      _
    // Predicated region
    $region30: #{tpu_custom_call.1} parent=1 // pred_check
      _
    $region31: #{tpu_custom_call.1} parent=1 // pred_check_branch
      %60 = sbr.rel (0) target = $region33
    $region32: #{tpu_custom_call.1} parent=1 // pred_region
      %61 = dma.done [#allocation6], 1024
    $region33: #{tpu_custom_call.1} parent=1 // pred_fallthru
      _
    %v63 = vld [vmem:[#allocation5] sm:$0xf]
    %v64 = vld [vmem:[#allocation5 + $0x4] sm:$0xf]
    %v65 = vld [vmem:[#allocation5 + $0x8] sm:$0xf]
    %v66 = vld [vmem:[#allocation5 + $0xc] sm:$0xf]
    %v67 = vld [vmem:[#allocation5 + $0x10] sm:$0xf]
    %v68 = vld [vmem:[#allocation5 + $0x14] sm:$0xf]
    %v69 = vld [vmem:[#allocation5 + $0x18] sm:$0xf]
    %v70 = vld [vmem:[#allocation5 + $0x1c] sm:$0xf]
    %v71 = vld [vmem:[#allocation5 + $0x20] sm:$0xf]
    %v72 = vld [vmem:[#allocation5 + $0x24] sm:$0xf]
    %v73 = vld [vmem:[#allocation5 + $0x28] sm:$0xf]
    %v74 = vld [vmem:[#allocation5 + $0x2c] sm:$0xf]
    %v75 = vld [vmem:[#allocation5 + $0x30] sm:$0xf]
    %v76 = vld [vmem:[#allocation5 + $0x34] sm:$0xf]
    %v77 = vld [vmem:[#allocation5 + $0x38] sm:$0xf]
    %v78 = vld [vmem:[#allocation5 + $0x3c] sm:$0xf]
    %v79 = vld [vmem:[%s2] sm:$0x1]
    %v80 = vld [vmem:[#allocation2] sm:$0xf]
    %v81 = vld [vmem:[#allocation2 + $0x4] sm:$0xf]
    %v82 = vld [vmem:[#allocation2 + $0x8] sm:$0xf]
    %v83 = vld [vmem:[#allocation2 + $0xc] sm:$0xf]
    %v84 = vld [vmem:[#allocation2 + $0x10] sm:$0xf]
    %v85 = vld [vmem:[#allocation2 + $0x14] sm:$0xf]
    %v86 = vld [vmem:[#allocation2 + $0x18] sm:$0xf]
    %v87 = vld [vmem:[#allocation2 + $0x1c] sm:$0xf]
    %v88 = vld [vmem:[#allocation2 + $0x20] sm:$0xf]
    %v89 = vld [vmem:[#allocation2 + $0x24] sm:$0xf]
    %v90 = vld [vmem:[#allocation2 + $0x28] sm:$0xf]
    %v91 = vld [vmem:[#allocation2 + $0x2c] sm:$0xf]
    %v92 = vld [vmem:[#allocation2 + $0x30] sm:$0xf]
    %v93 = vld [vmem:[#allocation2 + $0x34] sm:$0xf]
    %v94 = vld [vmem:[#allocation2 + $0x38] sm:$0xf]
    %v95 = vld [vmem:[#allocation2 + $0x3c] sm:$0xf]
    %v97 = vlaneseq
    %v98 = vshrl.u32 %v97, 7
    %v99 = vsub.s32 0, %v98
    %v100 = vrot.slane %v79, %v99
    %v118 = vunpack.c.l.b16 %v80
    %v119 = vunpack.c.l.b16 %v81
    %v120 = vunpack.c.l.b16 %v82
    %v121 = vunpack.c.l.b16 %v83
    %v122 = vunpack.c.l.b16 %v84
    %v123 = vunpack.c.l.b16 %v85
    %v124 = vunpack.c.l.b16 %v86
    %v125 = vunpack.c.l.b16 %v87
    %v126 = vunpack.c.l.b16 %v88
    %v127 = vunpack.c.l.b16 %v89
    %v128 = vunpack.c.l.b16 %v90
    %v129 = vunpack.c.l.b16 %v91
    %v130 = vunpack.c.l.b16 %v92
    %v131 = vunpack.c.l.b16 %v93
    %v132 = vunpack.c.l.b16 %v94
    %v133 = vunpack.c.l.b16 %v95
    %v134 = vpack.c.b16 %v119, %v118
    %v135 = vpack.c.b16 %v121, %v120
    %v136 = vpack.c.b16 %v123, %v122
    %v137 = vpack.c.b16 %v125, %v124
    %v138 = vpack.c.b16 %v127, %v126
    %v139 = vpack.c.b16 %v129, %v128
    %v140 = vpack.c.b16 %v131, %v130
    %v141 = vpack.c.b16 %v133, %v132
    %v166 = vunpack.c.l.b16 %v63
    %v167 = vunpack.c.l.b16 %v64
    %v168 = vunpack.c.l.b16 %v65
    %v169 = vunpack.c.l.b16 %v66
    %v170 = vunpack.c.l.b16 %v67
    %v171 = vunpack.c.l.b16 %v68
    %v172 = vunpack.c.l.b16 %v69
    %v173 = vunpack.c.l.b16 %v70
    %v174 = vunpack.c.l.b16 %v71
    %v175 = vunpack.c.l.b16 %v72
    %v176 = vunpack.c.l.b16 %v73
    %v177 = vunpack.c.l.b16 %v74
    %v178 = vunpack.c.l.b16 %v75
    %v179 = vunpack.c.l.b16 %v76
    %v180 = vunpack.c.l.b16 %v77
    %v181 = vunpack.c.l.b16 %v78
    %v182 = vpack.c.b16 %v167, %v166
    %v183 = vpack.c.b16 %v169, %v168
    %v184 = vpack.c.b16 %v171, %v170
    %v185 = vpack.c.b16 %v173, %v172
    %v186 = vpack.c.b16 %v175, %v174
    %v187 = vpack.c.b16 %v177, %v176
    %v188 = vpack.c.b16 %v179, %v178
    %v189 = vpack.c.b16 %v181, %v180
    %198 = vmatprep.subr.bf16.mxu0 0
    %199 = vmatpush1.bf16.msra.mxu0 %v182
    %200 = vmatprep.subr.bf16.mxu0 0
    %201 = vmatpush1.bf16.msra.mxu0 %v183
    %202 = vmatprep.subr.bf16.mxu0 0
    %203 = vmatpush1.bf16.msra.mxu0 %v184
    %204 = vmatprep.subr.bf16.mxu0 0
    %205 = vmatpush1.bf16.msra.mxu0 %v185
    %206 = vmatprep.subr.bf16.mxu0 0
    %207 = vmatpush1.bf16.msra.mxu0 %v186
    %208 = vmatprep.subr.bf16.mxu0 0
    %209 = vmatpush1.bf16.msra.mxu0 %v187
    %210 = vmatprep.subr.bf16.mxu0 0
    %211 = vmatpush1.bf16.msra.mxu0 %v188
    %212 = vmatprep.subr.bf16.mxu0 0
    %213 = vmatpush1.bf16.msra.mxu0 %v189
    %214 = vmatprep.subr.bf16.mxu0 0
    %215 = vmatpush1.bf16.msra.mxu0 0
    %216 = vmatprep.subr.bf16.mxu0 0
    %217 = vmatpush1.bf16.msra.mxu0 0
    %218 = vmatprep.subr.bf16.mxu0 0
    %219 = vmatpush1.bf16.msra.mxu0 0
    %220 = vmatprep.subr.bf16.mxu0 0
    %221 = vmatpush1.bf16.msra.mxu0 0
    %222 = vmatprep.subr.bf16.mxu0 0
    %223 = vmatpush1.bf16.msra.mxu0 0
    %224 = vmatprep.subr.bf16.mxu0 0
    %225 = vmatpush1.bf16.msra.mxu0 0
    %226 = vmatprep.subr.bf16.mxu0 0
    %227 = vmatpush1.bf16.msra.mxu0 0
    %228 = vmatprep.subr.bf16.mxu0 0
    %229 = vmatpush1.bf16.msra.mxu0 0
    %230 = vmatprep.mubr.bf16.mxu0 0
    %231 = vmatmul.mubr.bf16.gmra.mrb[0].mxu0 %v134
    %v232 = vpop.f32.mrb[0].mxu0
    %v233 = vadd.f32 %v100, %v232
    %v234 = vpop.f32.mrb[0].mxu0
    %v235 = vpop.f32.mrb[0].mxu0
    %v236 = vadd.f32 %v100, %v235
    %v237 = vpop.f32.mrb[0].mxu0
    %238 = vmatprep.mubr.bf16.mxu0 0
    %239 = vmatmul.mubr.bf16.gmra.mrb[0].mxu0 %v135
    %v240 = vpop.f32.mrb[0].mxu0
    %v241 = vadd.f32 %v100, %v240
    %v242 = vpop.f32.mrb[0].mxu0
    %v243 = vpop.f32.mrb[0].mxu0
    %v244 = vadd.f32 %v100, %v243
    %v245 = vpop.f32.mrb[0].mxu0
    %246 = vmatprep.mubr.bf16.mxu0 0
    %247 = vmatmul.mubr.bf16.gmra.mrb[0].mxu0 %v136
    %v248 = vpop.f32.mrb[0].mxu0
    %v249 = vadd.f32 %v100, %v248
    %v250 = vpop.f32.mrb[0].mxu0
    %v251 = vpop.f32.mrb[0].mxu0
    %v252 = vadd.f32 %v100, %v251
    %v253 = vpop.f32.mrb[0].mxu0
    %254 = vmatprep.mubr.bf16.mxu0 0
    %255 = vmatmul.mubr.bf16.gmra.mrb[0].mxu0 %v137
    %v256 = vpop.f32.mrb[0].mxu0
    %v257 = vadd.f32 %v100, %v256
    %v258 = vpop.f32.mrb[0].mxu0
    %v259 = vpop.f32.mrb[0].mxu0
    %v260 = vadd.f32 %v100, %v259
    %v261 = vpop.f32.mrb[0].mxu0
    %262 = vmatprep.mubr.bf16.mxu0 0
    %263 = vmatmul.mubr.bf16.gmra.mrb[0].mxu0 %v138
    %v264 = vpop.f32.mrb[0].mxu0
    %v265 = vadd.f32 %v100, %v264
    %v266 = vpop.f32.mrb[0].mxu0
    %v267 = vpop.f32.mrb[0].mxu0
    %v268 = vadd.f32 %v100, %v267
    %v269 = vpop.f32.mrb[0].mxu0
    %270 = vmatprep.mubr.bf16.mxu0 0
    %271 = vmatmul.mubr.bf16.gmra.mrb[0].mxu0 %v139
    %v272 = vpop.f32.mrb[0].mxu0
    %v273 = vadd.f32 %v100, %v272
    %v274 = vpop.f32.mrb[0].mxu0
    %v275 = vpop.f32.mrb[0].mxu0
    %v276 = vadd.f32 %v100, %v275
    %v277 = vpop.f32.mrb[0].mxu0
    %278 = vmatprep.mubr.bf16.mxu0 0
    %279 = vmatmul.mubr.bf16.gmra.mrb[0].mxu0 %v140
    %v280 = vpop.f32.mrb[0].mxu0
    %v281 = vadd.f32 %v100, %v280
    %v282 = vpop.f32.mrb[0].mxu0
    %v283 = vpop.f32.mrb[0].mxu0
    %v284 = vadd.f32 %v100, %v283
    %v285 = vpop.f32.mrb[0].mxu0
    %286 = vmatprep.mubr.bf16.mxu0 0
    %287 = vmatmul.mubr.bf16.gmra.mrb[0].mxu0 %v141
    %v288 = vpop.f32.mrb[0].mxu0
    %v289 = vadd.f32 %v100, %v288
    %v290 = vpop.f32.mrb[0].mxu0
    %v291 = vpop.f32.mrb[0].mxu0
    %v292 = vadd.f32 %v100, %v291
    %v293 = vpop.f32.mrb[0].mxu0
    %294 = vdwg.mxu0
    %v295 = vmax.f32 %v233, 0.0
    %v296 = vmax.f32 %v236, 0.0
    %v297 = vmax.f32 %v241, 0.0
    %v298 = vmax.f32 %v244, 0.0
    %v299 = vmax.f32 %v249, 0.0
    %v300 = vmax.f32 %v252, 0.0
    %v301 = vmax.f32 %v257, 0.0
    %v302 = vmax.f32 %v260, 0.0
    %v303 = vmax.f32 %v265, 0.0
    %v304 = vmax.f32 %v268, 0.0
    %v305 = vmax.f32 %v273, 0.0
    %v306 = vmax.f32 %v276, 0.0
    %v307 = vmax.f32 %v281, 0.0
    %v308 = vmax.f32 %v284, 0.0
    %v309 = vmax.f32 %v289, 0.0
    %v310 = vmax.f32 %v292, 0.0
    %v311 = vadd.f32 %v295, %v296
    %v312 = vadd.f32 %v311, %v297
    %v313 = vadd.f32 %v312, %v298
    %v314 = vadd.f32 %v313, %v299
    %v315 = vadd.f32 %v314, %v300
    %v316 = vadd.f32 %v315, %v301
    %v317 = vadd.f32 %v316, %v302
    %v318 = vadd.f32 %v317, %v303
    %v319 = vadd.f32 %v318, %v304
    %v320 = vadd.f32 %v319, %v305
    %v321 = vadd.f32 %v320, %v306
    %v322 = vadd.f32 %v321, %v307
    %v323 = vadd.f32 %v322, %v308
    %v324 = vadd.f32 %v323, %v309
    %v325 = vadd.f32 %v324, %v310
    %v326 = vrot.slane %v325, 4
    %v327 = vadd.f32 %v325, %v326
    %v328 = vrot.slane %v327, 2
    %v329 = vadd.f32 %v327, %v328
    %v330 = vrot.slane %v329, 1
    %v331 = vadd.f32 %v329, %v330
    %v332 = vadd.f32 %v331, 0.0
    %v333 = vld [vmem:[#allocation2 + $0x40] sm:$0xf]
    %v334 = vld [vmem:[#allocation2 + $0x44] sm:$0xf]
    %v335 = vld [vmem:[#allocation2 + $0x48] sm:$0xf]
    %v336 = vld [vmem:[#allocation2 + $0x4c] sm:$0xf]
    %v337 = vld [vmem:[#allocation2 + $0x50] sm:$0xf]
    %v338 = vld [vmem:[#allocation2 + $0x54] sm:$0xf]
    %v339 = vld [vmem:[#allocation2 + $0x58] sm:$0xf]
    %v340 = vld [vmem:[#allocation2 + $0x5c] sm:$0xf]
    %v341 = vld [vmem:[#allocation2 + $0x60] sm:$0xf]
    %v342 = vld [vmem:[#allocation2 + $0x64] sm:$0xf]
    %v343 = vld [vmem:[#allocation2 + $0x68] sm:$0xf]
    %v344 = vld [vmem:[#allocation2 + $0x6c] sm:$0xf]
    %v345 = vld [vmem:[#allocation2 + $0x70] sm:$0xf]
    %v346 = vld [vmem:[#allocation2 + $0x74] sm:$0xf]
    %v347 = vld [vmem:[#allocation2 + $0x78] sm:$0xf]
    %v348 = vld [vmem:[#allocation2 + $0x7c] sm:$0xf]
    %v365 = vunpack.c.l.b16 %v333
    %v366 = vunpack.c.l.b16 %v334
    %v367 = vunpack.c.l.b16 %v335
    %v368 = vunpack.c.l.b16 %v336
    %v369 = vunpack.c.l.b16 %v337
    %v370 = vunpack.c.l.b16 %v338
    %v371 = vunpack.c.l.b16 %v339
    %v372 = vunpack.c.l.b16 %v340
    %v373 = vunpack.c.l.b16 %v341
    %v374 = vunpack.c.l.b16 %v342
    %v375 = vunpack.c.l.b16 %v343
    %v376 = vunpack.c.l.b16 %v344
    %v377 = vunpack.c.l.b16 %v345
    %v378 = vunpack.c.l.b16 %v346
    %v379 = vunpack.c.l.b16 %v347
    %v380 = vunpack.c.l.b16 %v348
    %v381 = vpack.c.b16 %v366, %v365
    %v382 = vpack.c.b16 %v368, %v367
    %v383 = vpack.c.b16 %v370, %v369
    %v384 = vpack.c.b16 %v372, %v371
    %v385 = vpack.c.b16 %v374, %v373
    %v386 = vpack.c.b16 %v376, %v375
    %v387 = vpack.c.b16 %v378, %v377
    %v388 = vpack.c.b16 %v380, %v379
    %397 = vmatprep.subr.bf16.mxu0 0
    %398 = vmatpush1.bf16.msra.mxu0 %v182
    %399 = vmatprep.subr.bf16.mxu0 0
    %400 = vmatpush1.bf16.msra.mxu0 %v183
    %401 = vmatprep.subr.bf16.mxu0 0
    %402 = vmatpush1.bf16.msra.mxu0 %v184
    %403 = vmatprep.subr.bf16.mxu0 0
    %404 = vmatpush1.bf16.msra.mxu0 %v185
    %405 = vmatprep.subr.bf16.mxu0 0
    %406 = vmatpush1.bf16.msra.mxu0 %v186
    %407 = vmatprep.subr.bf16.mxu0 0
    %408 = vmatpush1.bf16.msra.mxu0 %v187
    %409 = vmatprep.subr.bf16.mxu0 0
    %410 = vmatpush1.bf16.msra.mxu0 %v188
    %411 = vmatprep.subr.bf16.mxu0 0
    %412 = vmatpush1.bf16.msra.mxu0 %v189
    %413 = vmatprep.subr.bf16.mxu0 0
    %414 = vmatpush1.bf16.msra.mxu0 0
    %415 = vmatprep.subr.bf16.mxu0 0
    %416 = vmatpush1.bf16.msra.mxu0 0
    %417 = vmatprep.subr.bf16.mxu0 0
    %418 = vmatpush1.bf16.msra.mxu0 0
    %419 = vmatprep.subr.bf16.mxu0 0
    %420 = vmatpush1.bf16.msra.mxu0 0
    %421 = vmatprep.subr.bf16.mxu0 0
    %422 = vmatpush1.bf16.msra.mxu0 0
    %423 = vmatprep.subr.bf16.mxu0 0
    %424 = vmatpush1.bf16.msra.mxu0 0
    %425 = vmatprep.subr.bf16.mxu0 0
    %426 = vmatpush1.bf16.msra.mxu0 0
    %427 = vmatprep.subr.bf16.mxu0 0
    %428 = vmatpush1.bf16.msra.mxu0 0
    %429 = vmatprep.mubr.bf16.mxu0 0
    %430 = vmatmul.mubr.bf16.gmra.mrb[0].mxu0 %v381
    %v431 = vpop.f32.mrb[0].mxu0
    %v432 = vadd.f32 %v100, %v431
    %v433 = vpop.f32.mrb[0].mxu0
    %v434 = vpop.f32.mrb[0].mxu0
    %v435 = vadd.f32 %v100, %v434
    %v436 = vpop.f32.mrb[0].mxu0
    %437 = vmatprep.mubr.bf16.mxu0 0
    %438 = vmatmul.mubr.bf16.gmra.mrb[0].mxu0 %v382
    %v439 = vpop.f32.mrb[0].mxu0
    %v440 = vadd.f32 %v100, %v439
    %v441 = vpop.f32.mrb[0].mxu0
    %v442 = vpop.f32.mrb[0].mxu0
    %v443 = vadd.f32 %v100, %v442
    %v444 = vpop.f32.mrb[0].mxu0
    %445 = vmatprep.mubr.bf16.mxu0 0
    %446 = vmatmul.mubr.bf16.gmra.mrb[0].mxu0 %v383
    %v447 = vpop.f32.mrb[0].mxu0
    %v448 = vadd.f32 %v100, %v447
    %v449 = vpop.f32.mrb[0].mxu0
    %v450 = vpop.f32.mrb[0].mxu0
    %v451 = vadd.f32 %v100, %v450
    %v452 = vpop.f32.mrb[0].mxu0
    %453 = vmatprep.mubr.bf16.mxu0 0
    %454 = vmatmul.mubr.bf16.gmra.mrb[0].mxu0 %v384
    %v455 = vpop.f32.mrb[0].mxu0
    %v456 = vadd.f32 %v100, %v455
    %v457 = vpop.f32.mrb[0].mxu0
    %v458 = vpop.f32.mrb[0].mxu0
    %v459 = vadd.f32 %v100, %v458
    %v460 = vpop.f32.mrb[0].mxu0
    %461 = vmatprep.mubr.bf16.mxu0 0
    %462 = vmatmul.mubr.bf16.gmra.mrb[0].mxu0 %v385
    %v463 = vpop.f32.mrb[0].mxu0
    %v464 = vadd.f32 %v100, %v463
    %v465 = vpop.f32.mrb[0].mxu0
    %v466 = vpop.f32.mrb[0].mxu0
    %v467 = vadd.f32 %v100, %v466
    %v468 = vpop.f32.mrb[0].mxu0
    %469 = vmatprep.mubr.bf16.mxu0 0
    %470 = vmatmul.mubr.bf16.gmra.mrb[0].mxu0 %v386
    %v471 = vpop.f32.mrb[0].mxu0
    %v472 = vadd.f32 %v100, %v471
    %v473 = vpop.f32.mrb[0].mxu0
    %v474 = vpop.f32.mrb[0].mxu0
    %v475 = vadd.f32 %v100, %v474
    %v476 = vpop.f32.mrb[0].mxu0
    %477 = vmatprep.mubr.bf16.mxu0 0
    %478 = vmatmul.mubr.bf16.gmra.mrb[0].mxu0 %v387
    %v479 = vpop.f32.mrb[0].mxu0
    %v480 = vadd.f32 %v100, %v479
    %v481 = vpop.f32.mrb[0].mxu0
    %v482 = vpop.f32.mrb[0].mxu0
    %v483 = vadd.f32 %v100, %v482
    %v484 = vpop.f32.mrb[0].mxu0
    %485 = vmatprep.mubr.bf16.mxu0 0
    %486 = vmatmul.mubr.bf16.gmra.mrb[0].mxu0 %v388
    %v487 = vpop.f32.mrb[0].mxu0
    %v488 = vadd.f32 %v100, %v487
    %v489 = vpop.f32.mrb[0].mxu0
    %v490 = vpop.f32.mrb[0].mxu0
    %v491 = vadd.f32 %v100, %v490
    %v492 = vpop.f32.mrb[0].mxu0
    %493 = vdwg.mxu0
    %v494 = vmax.f32 %v432, 0.0
    %v495 = vmax.f32 %v435, 0.0
    %v496 = vmax.f32 %v440, 0.0
    %v497 = vmax.f32 %v443, 0.0
    %v498 = vmax.f32 %v448, 0.0
    %v499 = vmax.f32 %v451, 0.0
    %v500 = vmax.f32 %v456, 0.0
    %v501 = vmax.f32 %v459, 0.0
    %v502 = vmax.f32 %v464, 0.0
    %v503 = vmax.f32 %v467, 0.0
    %v504 = vmax.f32 %v472, 0.0
    %v505 = vmax.f32 %v475, 0.0
    %v506 = vmax.f32 %v480, 0.0
    %v507 = vmax.f32 %v483, 0.0
    %v508 = vmax.f32 %v488, 0.0
    %v509 = vmax.f32 %v491, 0.0
    %v510 = vadd.f32 %v494, %v495
    %v511 = vadd.f32 %v510, %v496
    %v512 = vadd.f32 %v511, %v497
    %v513 = vadd.f32 %v512, %v498
    %v514 = vadd.f32 %v513, %v499
    %v515 = vadd.f32 %v514, %v500
    %v516 = vadd.f32 %v515, %v501
    %v517 = vadd.f32 %v516, %v502
    %v518 = vadd.f32 %v517, %v503
    %v519 = vadd.f32 %v518, %v504
    %v520 = vadd.f32 %v519, %v505
    %v521 = vadd.f32 %v520, %v506
    %v522 = vadd.f32 %v521, %v507
    %v523 = vadd.f32 %v522, %v508
    %v524 = vadd.f32 %v523, %v509
    %v525 = vrot.slane %v524, 4
    %v526 = vadd.f32 %v524, %v525
    %v527 = vrot.slane %v526, 2
    %v528 = vadd.f32 %v526, %v527
    %v529 = vrot.slane %v528, 1
    %v530 = vadd.f32 %v528, %v529
    %v531 = vadd.f32 %v332, %v530
    %v532 = vmul.f32 %v531, 0.00390625
    %v533 = vld [vmem:[#allocation2 + $0x80] sm:$0xf]
    %v534 = vld [vmem:[#allocation2 + $0x84] sm:$0xf]
    %v535 = vld [vmem:[#allocation2 + $0x88] sm:$0xf]
    %v536 = vld [vmem:[#allocation2 + $0x8c] sm:$0xf]
    %v537 = vld [vmem:[#allocation2 + $0x90] sm:$0xf]
    %v538 = vld [vmem:[#allocation2 + $0x94] sm:$0xf]
    %v539 = vld [vmem:[#allocation2 + $0x98] sm:$0xf]
    %v540 = vld [vmem:[#allocation2 + $0x9c] sm:$0xf]
    %v541 = vld [vmem:[#allocation2 + $0xa0] sm:$0xf]
    %v542 = vld [vmem:[#allocation2 + $0xa4] sm:$0xf]
    %v543 = vld [vmem:[#allocation2 + $0xa8] sm:$0xf]
    %v544 = vld [vmem:[#allocation2 + $0xac] sm:$0xf]
    %v545 = vld [vmem:[#allocation2 + $0xb0] sm:$0xf]
    %v546 = vld [vmem:[#allocation2 + $0xb4] sm:$0xf]
    %v547 = vld [vmem:[#allocation2 + $0xb8] sm:$0xf]
    %v548 = vld [vmem:[#allocation2 + $0xbc] sm:$0xf]
    %v565 = vunpack.c.l.b16 %v533
    %v566 = vunpack.c.l.b16 %v534
    %v567 = vunpack.c.l.b16 %v535
    %v568 = vunpack.c.l.b16 %v536
    %v569 = vunpack.c.l.b16 %v537
    %v570 = vunpack.c.l.b16 %v538
    %v571 = vunpack.c.l.b16 %v539
    %v572 = vunpack.c.l.b16 %v540
    %v573 = vunpack.c.l.b16 %v541
    %v574 = vunpack.c.l.b16 %v542
    %v575 = vunpack.c.l.b16 %v543
    %v576 = vunpack.c.l.b16 %v544
    %v577 = vunpack.c.l.b16 %v545
    %v578 = vunpack.c.l.b16 %v546
    %v579 = vunpack.c.l.b16 %v547
    %v580 = vunpack.c.l.b16 %v548
    %v581 = vpack.c.b16 %v566, %v565
    %v582 = vpack.c.b16 %v568, %v567
    %v583 = vpack.c.b16 %v570, %v569
    %v584 = vpack.c.b16 %v572, %v571
    %v585 = vpack.c.b16 %v574, %v573
    %v586 = vpack.c.b16 %v576, %v575
    %v587 = vpack.c.b16 %v578, %v577
    %v588 = vpack.c.b16 %v580, %v579
    %597 = vmatprep.subr.bf16.mxu0 0
    %598 = vmatpush1.bf16.msra.mxu0 %v182
    %599 = vmatprep.subr.bf16.mxu0 0
    %600 = vmatpush1.bf16.msra.mxu0 %v183
    %601 = vmatprep.subr.bf16.mxu0 0
    %602 = vmatpush1.bf16.msra.mxu0 %v184
    %603 = vmatprep.subr.bf16.mxu0 0
    %604 = vmatpush1.bf16.msra.mxu0 %v185
    %605 = vmatprep.subr.bf16.mxu0 0
    %606 = vmatpush1.bf16.msra.mxu0 %v186
    %607 = vmatprep.subr.bf16.mxu0 0
    %608 = vmatpush1.bf16.msra.mxu0 %v187
    %609 = vmatprep.subr.bf16.mxu0 0
    %610 = vmatpush1.bf16.msra.mxu0 %v188
    %611 = vmatprep.subr.bf16.mxu0 0
    %612 = vmatpush1.bf16.msra.mxu0 %v189
    %613 = vmatprep.subr.bf16.mxu0 0
    %614 = vmatpush1.bf16.msra.mxu0 0
    %615 = vmatprep.subr.bf16.mxu0 0
    %616 = vmatpush1.bf16.msra.mxu0 0
    %617 = vmatprep.subr.bf16.mxu0 0
    %618 = vmatpush1.bf16.msra.mxu0 0
    %619 = vmatprep.subr.bf16.mxu0 0
    %620 = vmatpush1.bf16.msra.mxu0 0
    %621 = vmatprep.subr.bf16.mxu0 0
    %622 = vmatpush1.bf16.msra.mxu0 0
    %623 = vmatprep.subr.bf16.mxu0 0
    %624 = vmatpush1.bf16.msra.mxu0 0
    %625 = vmatprep.subr.bf16.mxu0 0
    %626 = vmatpush1.bf16.msra.mxu0 0
    %627 = vmatprep.subr.bf16.mxu0 0
    %628 = vmatpush1.bf16.msra.mxu0 0
    %629 = vmatprep.mubr.bf16.mxu0 0
    %630 = vmatmul.mubr.bf16.gmra.mrb[0].mxu0 %v581
    %v631 = vpop.f32.mrb[0].mxu0
    %v632 = vadd.f32 %v100, %v631
    %v633 = vpop.f32.mrb[0].mxu0
    %v634 = vpop.f32.mrb[0].mxu0
    %v635 = vadd.f32 %v100, %v634
    %v636 = vpop.f32.mrb[0].mxu0
    %637 = vmatprep.mubr.bf16.mxu0 0
    %638 = vmatmul.mubr.bf16.gmra.mrb[0].mxu0 %v582
    %v639 = vpop.f32.mrb[0].mxu0
    %v640 = vadd.f32 %v100, %v639
    %v641 = vpop.f32.mrb[0].mxu0
    %v642 = vpop.f32.mrb[0].mxu0
    %v643 = vadd.f32 %v100, %v642
    %v644 = vpop.f32.mrb[0].mxu0
    %645 = vmatprep.mubr.bf16.mxu0 0
    %646 = vmatmul.mubr.bf16.gmra.mrb[0].mxu0 %v583
    %v647 = vpop.f32.mrb[0].mxu0
    %v648 = vadd.f32 %v100, %v647
    %v649 = vpop.f32.mrb[0].mxu0
    %v650 = vpop.f32.mrb[0].mxu0
    %v651 = vadd.f32 %v100, %v650
    %v652 = vpop.f32.mrb[0].mxu0
    %653 = vmatprep.mubr.bf16.mxu0 0
    %654 = vmatmul.mubr.bf16.gmra.mrb[0].mxu0 %v584
    %v655 = vpop.f32.mrb[0].mxu0
    %v656 = vadd.f32 %v100, %v655
    %v657 = vpop.f32.mrb[0].mxu0
    %v658 = vpop.f32.mrb[0].mxu0
    %v659 = vadd.f32 %v100, %v658
    %v660 = vpop.f32.mrb[0].mxu0
    %661 = vmatprep.mubr.bf16.mxu0 0
    %662 = vmatmul.mubr.bf16.gmra.mrb[0].mxu0 %v585
    %v663 = vpop.f32.mrb[0].mxu0
    %v664 = vadd.f32 %v100, %v663
    %v665 = vpop.f32.mrb[0].mxu0
    %v666 = vpop.f32.mrb[0].mxu0
    %v667 = vadd.f32 %v100, %v666
    %v668 = vpop.f32.mrb[0].mxu0
    %669 = vmatprep.mubr.bf16.mxu0 0
    %670 = vmatmul.mubr.bf16.gmra.mrb[0].mxu0 %v586
    %v671 = vpop.f32.mrb[0].mxu0
    %v672 = vadd.f32 %v100, %v671
    %v673 = vpop.f32.mrb[0].mxu0
    %v674 = vpop.f32.mrb[0].mxu0
    %v675 = vadd.f32 %v100, %v674
    %v676 = vpop.f32.mrb[0].mxu0
    %677 = vmatprep.mubr.bf16.mxu0 0
    %678 = vmatmul.mubr.bf16.gmra.mrb[0].mxu0 %v587
    %v679 = vpop.f32.mrb[0].mxu0
    %v680 = vadd.f32 %v100, %v679
    %v681 = vpop.f32.mrb[0].mxu0
    %v682 = vpop.f32.mrb[0].mxu0
    %v683 = vadd.f32 %v100, %v682
    %v684 = vpop.f32.mrb[0].mxu0
    %685 = vmatprep.mubr.bf16.mxu0 0
    %686 = vmatmul.mubr.bf16.gmra.mrb[0].mxu0 %v588
    %v687 = vpop.f32.mrb[0].mxu0
    %v688 = vadd.f32 %v100, %v687
    %v689 = vpop.f32.mrb[0].mxu0
    %v690 = vpop.f32.mrb[0].mxu0
    %v691 = vadd.f32 %v100, %v690
    %v692 = vpop.f32.mrb[0].mxu0
    %693 = vdwg.mxu0
    %v694 = vmax.f32 %v632, 0.0
    %v695 = vmax.f32 %v635, 0.0
    %v696 = vmax.f32 %v640, 0.0
    %v697 = vmax.f32 %v643, 0.0
    %v698 = vmax.f32 %v648, 0.0
    %v699 = vmax.f32 %v651, 0.0
    %v700 = vmax.f32 %v656, 0.0
    %v701 = vmax.f32 %v659, 0.0
    %v702 = vmax.f32 %v664, 0.0
    %v703 = vmax.f32 %v667, 0.0
    %v704 = vmax.f32 %v672, 0.0
    %v705 = vmax.f32 %v675, 0.0
    %v706 = vmax.f32 %v680, 0.0
    %v707 = vmax.f32 %v683, 0.0
    %v708 = vmax.f32 %v688, 0.0
    %v709 = vmax.f32 %v691, 0.0
    %v710 = vadd.f32 %v694, %v695
    %v711 = vadd.f32 %v710, %v696
    %v712 = vadd.f32 %v711, %v697
    %v713 = vadd.f32 %v712, %v698
    %v714 = vadd.f32 %v713, %v699
    %v715 = vadd.f32 %v714, %v700
    %v716 = vadd.f32 %v715, %v701
    %v717 = vadd.f32 %v716, %v702
    %v718 = vadd.f32 %v717, %v703
    %v719 = vadd.f32 %v718, %v704
    %v720 = vadd.f32 %v719, %v705
    %v721 = vadd.f32 %v720, %v706
    %v722 = vadd.f32 %v721, %v707
    %v723 = vadd.f32 %v722, %v708
    %v724 = vadd.f32 %v723, %v709
    %v725 = vrot.slane %v724, 4
    %v726 = vadd.f32 %v724, %v725
    %v727 = vrot.slane %v726, 2
    %v728 = vadd.f32 %v726, %v727
    %v729 = vrot.slane %v728, 1
    %v730 = vadd.f32 %v728, %v729
    %v731 = vadd.f32 %v730, 0.0
    %v732 = vld [vmem:[#allocation2 + $0xc0] sm:$0xf]
    %v733 = vld [vmem:[#allocation2 + $0xc4] sm:$0xf]
    %v734 = vld [vmem:[#allocation2 + $0xc8] sm:$0xf]
    %v735 = vld [vmem:[#allocation2 + $0xcc] sm:$0xf]
    %v736 = vld [vmem:[#allocation2 + $0xd0] sm:$0xf]
    %v737 = vld [vmem:[#allocation2 + $0xd4] sm:$0xf]
    %v738 = vld [vmem:[#allocation2 + $0xd8] sm:$0xf]
    %v739 = vld [vmem:[#allocation2 + $0xdc] sm:$0xf]
    %v740 = vld [vmem:[#allocation2 + $0xe0] sm:$0xf]
    %v741 = vld [vmem:[#allocation2 + $0xe4] sm:$0xf]
    %v742 = vld [vmem:[#allocation2 + $0xe8] sm:$0xf]
    %v743 = vld [vmem:[#allocation2 + $0xec] sm:$0xf]
    %v744 = vld [vmem:[#allocation2 + $0xf0] sm:$0xf]
    %v745 = vld [vmem:[#allocation2 + $0xf4] sm:$0xf]
    %v746 = vld [vmem:[#allocation2 + $0xf8] sm:$0xf]
    %v747 = vld [vmem:[#allocation2 + $0xfc] sm:$0xf]
    %v764 = vunpack.c.l.b16 %v732
    %v765 = vunpack.c.l.b16 %v733
    %v766 = vunpack.c.l.b16 %v734
    %v767 = vunpack.c.l.b16 %v735
    %v768 = vunpack.c.l.b16 %v736
    %v769 = vunpack.c.l.b16 %v737
    %v770 = vunpack.c.l.b16 %v738
    %v771 = vunpack.c.l.b16 %v739
    %v772 = vunpack.c.l.b16 %v740
    %v773 = vunpack.c.l.b16 %v741
    %v774 = vunpack.c.l.b16 %v742
    %v775 = vunpack.c.l.b16 %v743
    %v776 = vunpack.c.l.b16 %v744
    %v777 = vunpack.c.l.b16 %v745
    %v778 = vunpack.c.l.b16 %v746
    %v779 = vunpack.c.l.b16 %v747
    %v780 = vpack.c.b16 %v765, %v764
    %v781 = vpack.c.b16 %v767, %v766
    %v782 = vpack.c.b16 %v769, %v768
    %v783 = vpack.c.b16 %v771, %v770
    %v784 = vpack.c.b16 %v773, %v772
    %v785 = vpack.c.b16 %v775, %v774
    %v786 = vpack.c.b16 %v777, %v776
    %v787 = vpack.c.b16 %v779, %v778
    %796 = vmatprep.subr.bf16.mxu0 0
    %797 = vmatpush1.bf16.msra.mxu0 %v182
    %798 = vmatprep.subr.bf16.mxu0 0
    %799 = vmatpush1.bf16.msra.mxu0 %v183
    %800 = vmatprep.subr.bf16.mxu0 0
    %801 = vmatpush1.bf16.msra.mxu0 %v184
    %802 = vmatprep.subr.bf16.mxu0 0
    %803 = vmatpush1.bf16.msra.mxu0 %v185
    %804 = vmatprep.subr.bf16.mxu0 0
    %805 = vmatpush1.bf16.msra.mxu0 %v186
    %806 = vmatprep.subr.bf16.mxu0 0
    %807 = vmatpush1.bf16.msra.mxu0 %v187
    %808 = vmatprep.subr.bf16.mxu0 0
    %809 = vmatpush1.bf16.msra.mxu0 %v188
    %810 = vmatprep.subr.bf16.mxu0 0
    %811 = vmatpush1.bf16.msra.mxu0 %v189
    %812 = vmatprep.subr.bf16.mxu0 0
    %813 = vmatpush1.bf16.msra.mxu0 0
    %814 = vmatprep.subr.bf16.mxu0 0
    %815 = vmatpush1.bf16.msra.mxu0 0
    %816 = vmatprep.subr.bf16.mxu0 0
    %817 = vmatpush1.bf16.msra.mxu0 0
    %818 = vmatprep.subr.bf16.mxu0 0
    %819 = vmatpush1.bf16.msra.mxu0 0
    %820 = vmatprep.subr.bf16.mxu0 0
    %821 = vmatpush1.bf16.msra.mxu0 0
    %822 = vmatprep.subr.bf16.mxu0 0
    %823 = vmatpush1.bf16.msra.mxu0 0
    %824 = vmatprep.subr.bf16.mxu0 0
    %825 = vmatpush1.bf16.msra.mxu0 0
    %826 = vmatprep.subr.bf16.mxu0 0
    %827 = vmatpush1.bf16.msra.mxu0 0
    %828 = vmatprep.mubr.bf16.mxu0 0
    %829 = vmatmul.mubr.bf16.gmra.mrb[0].mxu0 %v780
    %v830 = vpop.f32.mrb[0].mxu0
    %v831 = vadd.f32 %v100, %v830
    %v832 = vpop.f32.mrb[0].mxu0
    %v833 = vpop.f32.mrb[0].mxu0
    %v834 = vadd.f32 %v100, %v833
    %v835 = vpop.f32.mrb[0].mxu0
    %836 = vmatprep.mubr.bf16.mxu0 0
    %837 = vmatmul.mubr.bf16.gmra.mrb[0].mxu0 %v781
    %v838 = vpop.f32.mrb[0].mxu0
    %v839 = vadd.f32 %v100, %v838
    %v840 = vpop.f32.mrb[0].mxu0
    %v841 = vpop.f32.mrb[0].mxu0
    %v842 = vadd.f32 %v100, %v841
    %v843 = vpop.f32.mrb[0].mxu0
    %844 = vmatprep.mubr.bf16.mxu0 0
    %845 = vmatmul.mubr.bf16.gmra.mrb[0].mxu0 %v782
    %v846 = vpop.f32.mrb[0].mxu0
    %v847 = vadd.f32 %v100, %v846
    %v848 = vpop.f32.mrb[0].mxu0
    %v849 = vpop.f32.mrb[0].mxu0
    %v850 = vadd.f32 %v100, %v849
    %v851 = vpop.f32.mrb[0].mxu0
    %852 = vmatprep.mubr.bf16.mxu0 0
    %853 = vmatmul.mubr.bf16.gmra.mrb[0].mxu0 %v783
    %v854 = vpop.f32.mrb[0].mxu0
    %v855 = vadd.f32 %v100, %v854
    %v856 = vpop.f32.mrb[0].mxu0
    %v857 = vpop.f32.mrb[0].mxu0
    %v858 = vadd.f32 %v100, %v857
    %v859 = vpop.f32.mrb[0].mxu0
    %860 = vmatprep.mubr.bf16.mxu0 0
    %861 = vmatmul.mubr.bf16.gmra.mrb[0].mxu0 %v784
    %v862 = vpop.f32.mrb[0].mxu0
    %v863 = vadd.f32 %v100, %v862
    %v864 = vpop.f32.mrb[0].mxu0
    %v865 = vpop.f32.mrb[0].mxu0
    %v866 = vadd.f32 %v100, %v865
    %v867 = vpop.f32.mrb[0].mxu0
    %868 = vmatprep.mubr.bf16.mxu0 0
    %869 = vmatmul.mubr.bf16.gmra.mrb[0].mxu0 %v785
    %v870 = vpop.f32.mrb[0].mxu0
    %v871 = vadd.f32 %v100, %v870
    %v872 = vpop.f32.mrb[0].mxu0
    %v873 = vpop.f32.mrb[0].mxu0
    %v874 = vadd.f32 %v100, %v873
    %v875 = vpop.f32.mrb[0].mxu0
    %876 = vmatprep.mubr.bf16.mxu0 0
    %877 = vmatmul.mubr.bf16.gmra.mrb[0].mxu0 %v786
    %v878 = vpop.f32.mrb[0].mxu0
    %v879 = vadd.f32 %v100, %v878
    %v880 = vpop.f32.mrb[0].mxu0
    %v881 = vpop.f32.mrb[0].mxu0
    %v882 = vadd.f32 %v100, %v881
    %v883 = vpop.f32.mrb[0].mxu0
    %884 = vmatprep.mubr.bf16.mxu0 0
    %885 = vmatmul.mubr.bf16.gmra.mrb[0].mxu0 %v787
    %v886 = vpop.f32.mrb[0].mxu0
    %v887 = vadd.f32 %v100, %v886
    %v888 = vpop.f32.mrb[0].mxu0
    %v889 = vpop.f32.mrb[0].mxu0
    %v890 = vadd.f32 %v100, %v889
    %v891 = vpop.f32.mrb[0].mxu0
    %892 = vdwg.mxu0
    %v893 = vmax.f32 %v831, 0.0
    %v894 = vmax.f32 %v834, 0.0
    %v895 = vmax.f32 %v839, 0.0
    %v896 = vmax.f32 %v842, 0.0
    %v897 = vmax.f32 %v847, 0.0
    %v898 = vmax.f32 %v850, 0.0
    %v899 = vmax.f32 %v855, 0.0
    %v900 = vmax.f32 %v858, 0.0
    %v901 = vmax.f32 %v863, 0.0
    %v902 = vmax.f32 %v866, 0.0
    %v903 = vmax.f32 %v871, 0.0
    %v904 = vmax.f32 %v874, 0.0
    %v905 = vmax.f32 %v879, 0.0
    %v906 = vmax.f32 %v882, 0.0
    %v907 = vmax.f32 %v887, 0.0
    %v908 = vmax.f32 %v890, 0.0
    %v909 = vadd.f32 %v893, %v894
    %v910 = vadd.f32 %v909, %v895
    %v911 = vadd.f32 %v910, %v896
    %v912 = vadd.f32 %v911, %v897
    %v913 = vadd.f32 %v912, %v898
    %v914 = vadd.f32 %v913, %v899
    %v915 = vadd.f32 %v914, %v900
    %v916 = vadd.f32 %v915, %v901
    %v917 = vadd.f32 %v916, %v902
    %v918 = vadd.f32 %v917, %v903
    %v919 = vadd.f32 %v918, %v904
    %v920 = vadd.f32 %v919, %v905
    %v921 = vadd.f32 %v920, %v906
    %v922 = vadd.f32 %v921, %v907
    %v923 = vadd.f32 %v922, %v908
    %v924 = vrot.slane %v923, 4
    %v925 = vadd.f32 %v923, %v924
    %v926 = vrot.slane %v925, 2
    %v927 = vadd.f32 %v925, %v926
    %v928 = vrot.slane %v927, 1
    %v929 = vadd.f32 %v927, %v928
    %v930 = vadd.f32 %v731, %v929
    %v931 = vmul.f32 %v930, 0.00390625
    %vm932 = vcmask 1040384
    %v933 = vsel %vm932, %v532, %v931
    %v934 = vld [vmem:[#allocation7] sm:$0xf]
    %v935 = vld [vmem:[#allocation7 + $0x4] sm:$0xf]
    %v936 = vld [vmem:[#allocation7 + $0x8] sm:$0xf]
    %v937 = vld [vmem:[#allocation7 + $0xc] sm:$0xf]
    %v938 = vld [vmem:[#allocation7 + $0x10] sm:$0xf]
    %v939 = vld [vmem:[#allocation7 + $0x14] sm:$0xf]
    %v940 = vld [vmem:[#allocation7 + $0x18] sm:$0xf]
    %v941 = vld [vmem:[#allocation7 + $0x1c] sm:$0xf]
    %v942 = vld [vmem:[#allocation7 + $0x20] sm:$0xf]
    %v943 = vld [vmem:[#allocation7 + $0x24] sm:$0xf]
    %v944 = vld [vmem:[#allocation7 + $0x28] sm:$0xf]
    %v945 = vld [vmem:[#allocation7 + $0x2c] sm:$0xf]
    %v946 = vld [vmem:[#allocation7 + $0x30] sm:$0xf]
    %v947 = vld [vmem:[#allocation7 + $0x34] sm:$0xf]
    %v948 = vld [vmem:[#allocation7 + $0x38] sm:$0xf]
    %v949 = vld [vmem:[#allocation7 + $0x3c] sm:$0xf]
    %v950 = vunpack.c.l.bf16 %v934
    %v951 = vunpack.c.l.bf16 %v935
    %v952 = vunpack.c.l.bf16 %v936
    %v953 = vunpack.c.l.bf16 %v937
    %v954 = vunpack.c.l.bf16 %v938
    %v955 = vunpack.c.l.bf16 %v939
    %v956 = vunpack.c.l.bf16 %v940
    %v957 = vunpack.c.l.bf16 %v941
    %v958 = vunpack.c.l.bf16 %v942
    %v959 = vunpack.c.l.bf16 %v943
    %v960 = vunpack.c.l.bf16 %v944
    %v961 = vunpack.c.l.bf16 %v945
    %v962 = vunpack.c.l.bf16 %v946
    %v963 = vunpack.c.l.bf16 %v947
    %v964 = vunpack.c.l.bf16 %v948
    %v965 = vunpack.c.l.bf16 %v949
    %v966 = vld [vmem:[%s4] sm:$0x1]
    %v968 = vlaneseq
    %v969 = vshrl.u32 %v968, 7
    %v970 = vsub.s32 0, %v969
    %v971 = vrot.slane %v966, %v970
    %973 = vmatprep.subr.mxu0 0.0
    %974 = vmatpush1.msra.mxu0 %v950
    %975 = vmatprep.subr.mxu0 0.0
    %976 = vmatpush1.msra.mxu0 %v951
    %977 = vmatprep.subr.mxu0 0.0
    %978 = vmatpush1.msra.mxu0 %v952
    %979 = vmatprep.subr.mxu0 0.0
    %980 = vmatpush1.msra.mxu0 %v953
    %981 = vmatprep.subr.mxu0 0.0
    %982 = vmatpush1.msra.mxu0 %v954
    %983 = vmatprep.subr.mxu0 0.0
    %984 = vmatpush1.msra.mxu0 %v955
    %985 = vmatprep.subr.mxu0 0.0
    %986 = vmatpush1.msra.mxu0 %v956
    %987 = vmatprep.subr.mxu0 0.0
    %988 = vmatpush1.msra.mxu0 %v957
    %989 = vmatprep.subr.mxu0 0.0
    %990 = vmatpush1.msra.mxu0 %v958
    %991 = vmatprep.subr.mxu0 0.0
    %992 = vmatpush1.msra.mxu0 %v959
    %993 = vmatprep.subr.mxu0 0.0
    %994 = vmatpush1.msra.mxu0 %v960
    %995 = vmatprep.subr.mxu0 0.0
    %996 = vmatpush1.msra.mxu0 %v961
    %997 = vmatprep.subr.mxu0 0.0
    %998 = vmatpush1.msra.mxu0 %v962
    %999 = vmatprep.subr.mxu0 0.0
    %1000 = vmatpush1.msra.mxu0 %v963
    %1001 = vmatprep.subr.mxu0 0.0
    %1002 = vmatpush1.msra.mxu0 %v964
    %1003 = vmatprep.subr.mxu0 0.0
    %1004 = vmatpush1.msra.mxu0 %v965
    %1005 = vmatprep.subr.mxu0 0.0
    %1006 = vmatpush1.msra.mxu0 0.0
    %1007 = vmatprep.subr.mxu0 0.0
    %1008 = vmatpush1.msra.mxu0 0.0
    %1009 = vmatprep.subr.mxu0 0.0
    %1010 = vmatpush1.msra.mxu0 0.0
    %1011 = vmatprep.subr.mxu0 0.0
    %1012 = vmatpush1.msra.mxu0 0.0
    %1013 = vmatprep.subr.mxu0 0.0
    %1014 = vmatpush1.msra.mxu0 0.0
    %1015 = vmatprep.subr.mxu0 0.0
    %1016 = vmatpush1.msra.mxu0 0.0
    %1017 = vmatprep.subr.mxu0 0.0
    %1018 = vmatpush1.msra.mxu0 0.0
    %1019 = vmatprep.subr.mxu0 0.0
    %1020 = vmatpush1.msra.mxu0 0.0
    %1021 = vmatprep.subr.mxu0 0.0
    %1022 = vmatpush1.msra.mxu0 0.0
    %1023 = vmatprep.subr.mxu0 0.0
    %1024 = vmatpush1.msra.mxu0 0.0
    %1025 = vmatprep.subr.mxu0 0.0
    %1026 = vmatpush1.msra.mxu0 0.0
    %1027 = vmatprep.subr.mxu0 0.0
    %1028 = vmatpush1.msra.mxu0 0.0
    %1029 = vmatprep.subr.mxu0 0.0
    %1030 = vmatpush1.msra.mxu0 0.0
    %1031 = vmatprep.subr.mxu0 0.0
    %1032 = vmatpush1.msra.mxu0 0.0
    %1033 = vmatprep.subr.mxu0 0.0
    %1034 = vmatpush1.msra.mxu0 0.0
    %1035 = vmatprep.subr.mxu0 0.0
    %1036 = vmatpush1.msra.mxu0 0.0
    %1037 = vmatprep.mubr.f32.mxu0 0.0
    %1038 = vmatmul.mubr.f32.gmra.mrb[0].mxu0 %v933
    %v1039 = vpop.f32.mrb[0].mxu0
    %v1040 = vadd.f32 %v971, %v1039
    %v1041 = vpop.f32.mrb[0].mxu0
    %1042 = vdwg.mxu0
    %v1043 = vxor.u32 %v1040, 2147483648
    %v1044 = vmul.f32 %v1043, 1.442695
    %v1045 = vpow.pop %v1044
    %v1046 = vadd.f32 %v1045, 1.0
    %v1047 = vrcp.pop %v1046
    %v1048 = vmul.f32 1.0, %v1047
    %1049 = vst [vmem:[#allocation8] sm:$0x3] %v1048
    // Predicated region
    $region34: #{tpu_custom_call.1} parent=1 // pred_check
      _
    $region35: #{tpu_custom_call.1} parent=1 // pred_check_branch
      %1051 = sbr.rel (0) target = $region37
    $region36: #{tpu_custom_call.1} parent=1 // pred_region
      %s1053 = ssub.s32 32, 32
      %1054 = vsyncadd [#allocation4], %s1053
      %s1056 = sshll.u32 [#allocation8], 4
      %s1057 = int_to_ptr.vmem [resolvable:$true] %s1056
      %1059 = dma.vmem_to_hbm [thread:$0]  %s1057, 32, %s5, [#allocation4]
    $region37: #{tpu_custom_call.1} parent=1 // pred_fallthru
      _
    // Predicated region
    $region38: #{tpu_custom_call.1} parent=1 // pred_check
      _
    $region39: #{tpu_custom_call.1} parent=1 // pred_check_branch
      %1061 = sbr.rel (0) target = $region41
    $region40: #{tpu_custom_call.1} parent=1 // pred_region
      %1062 = dma.done [#allocation4], 32
    $region41: #{tpu_custom_call.1} parent=1 // pred_fallthru
      _
    %1063 = vsyncpa [#allocation3], 1
    %1064 = vsyncpa [#allocation6], 1
    %1065 = vsyncpa [#allocation4], 1

</llo_original>
